<compile_context>
chip_gen: v7x
topology: tpu7x:2x2x1
jax: 0.10.0
libtpu: 0.0.40
codegen_flags: <defaults>
</compile_context>

<pallas_src>
import math

import jax
import jax.numpy as jnp
from jax.experimental import pallas as pl
from jax.experimental.pallas import tpu as pltpu


# --------------------------------------------------------------------------
# helpers
# --------------------------------------------------------------------------
def _pick_tile(dim, preferred):
    """Largest preferred tile (multiple of 128) dividing `dim`, else the full dim.

    Full-dim fallback keeps the (8,128) BlockSpec rule satisfied for small shapes
    (the toy test below uses full-dim tiles).
    # TODO(synk): large ragged dims fall back to one giant block; a padded / masked
    # partial-tile path is needed for production ragged shapes (bites v7x's 64 MiB VMEM).
    """
    for t in preferred:
        if t <= dim and dim % t == 0:
            return t
    return dim


# --------------------------------------------------------------------------
# Tiled linear:  out = x @ w_t + bias      (w_t is (K, N), pre-transposed at init)
# --------------------------------------------------------------------------
def _linear_kernel(x_ref, w_ref, b_ref, o_ref, acc_ref):
    k = pl.program_id(2)

    @pl.when(k == 0)
    def _init():
        acc_ref[...] = jnp.zeros_like(acc_ref)

    # Operands stay in their input dtype (bf16 on the fast path) -> native MXU format;
    # accumulate in f32.
    acc_ref[...] += jnp.dot(x_ref[...], w_ref[...],
                            preferred_element_type=jnp.float32)

    @pl.when(k == pl.num_programs(2) - 1)
    def _finalize():
        o_ref[...] = (acc_ref[...] + b_ref[...].astype(jnp.float32)).astype(o_ref.dtype)


def pallas_linear(x2d, w_t, bias, out_dtype=None):
    """x2d: (M, K); w_t: (K, N) pre-transposed once at init; bias: (N,) f32."""
    M, K = x2d.shape
    K2, N = w_t.shape
    assert K == K2
    out_dtype = x2d.dtype if out_dtype is None else out_dtype

    # 512-wide M/N tiles and K tiles up to 1024: fewer 'arbitrary'-axis steps / grid
    # overhead; per-step footprint stays a few MiB (bf16 operands, f32 acc) on every
    # generation including v7x.
    tm = _pick_tile(M, (512, 256, 128))
    tn = _pick_tile(N, (512, 256, 128))
    tk = _pick_tile(K, (1024, 512, 256, 128))
    b2 = bias.reshape(1, N)

    cost = pl.CostEstimate(
        flops=2 * M * N * K,
        transcendentals=0,
        bytes_accessed=(M * K + K * N) * x2d.dtype.itemsize
        + (N + M * N) * jnp.dtype(out_dtype).itemsize)

    return pl.pallas_call(
        _linear_kernel,
        out_shape=jax.ShapeDtypeStruct((M, N), out_dtype),
        grid=(M // tm, N // tn, K // tk),
        in_specs=[
            pl.BlockSpec((tm, tk), lambda i, j, k: (i, k)),
            pl.BlockSpec((tk, tn), lambda i, j, k: (k, j)),
            pl.BlockSpec((1, tn), lambda i, j, k: (0, j)),
        ],
        out_specs=pl.BlockSpec((tm, tn), lambda i, j, k: (i, j)),
        scratch_shapes=[pltpu.VMEM((tm, tn), jnp.float32)],
        compiler_params=pltpu.CompilerParams(
            dimension_semantics=("parallel", "parallel", "arbitrary")),
        cost_estimate=cost,
    )(x2d, w_t, b2)


# --------------------------------------------------------------------------
# Flash-style self-attention over the (B, S, H*d) projection output.
# Q = K = V (shared projection), so one "kv" operand serves both K and V.
# --------------------------------------------------------------------------
def _make_flash_attn_kernel(num_heads, head_dim, scale, has_mask):
    H, d = num_heads, head_dim

    def kernel(*refs):
        if has_mask:
            q_ref, kv_ref, mask_ref, o_ref, m_sc, l_sc, acc_sc, q_sc = refs
        else:
            q_ref, kv_ref, o_ref, m_sc, l_sc, acc_sc, q_sc = refs
            mask_ref = None

        kv_idx = pl.program_id(2)
        tq = q_ref.shape[1]
        tk = kv_ref.shape[1]

        @pl.when(kv_idx == 0)
        def _init():
            m_sc[...] = jnp.full_like(m_sc, -jnp.inf)
            l_sc[...] = jnp.zeros_like(l_sc)
            acc_sc[...] = jnp.zeros_like(acc_sc)
            # Scale + head-transpose Q once per query tile (Q block is resident across
            # the whole kv 'arbitrary' axis): (tq, H*d) -> (H, tq, d), times 1/sqrt(d).
            q3 = q_ref[0].reshape(tq, H, d)
            q_sc[...] = (jnp.transpose(q3, (1, 0, 2)) * scale).astype(q_sc.dtype)

        # Shared K/V tile: one DMA + one head-transpose per kv step serves both matmuls.
        kv_h = jnp.transpose(kv_ref[0].reshape(tk, H, d), (1, 0, 2))     # (H, tk, d)

        # Batched scores for all heads at once: (H, tq, tk), f32 accumulation on MXU.
        s = jnp.einsum('hqd,hkd->hqk', q_sc[...], kv_h,
                       preferred_element_type=jnp.float32)
        if has_mask:
            s = s + mask_ref[0, 0].astype(jnp.float32)                   # (1, tk) bcast

        m_prev = m_sc[...]                                               # (H, tq, 1)
        m_new = jnp.maximum(m_prev, jnp.max(s, axis=-1, keepdims=True))
        alpha = jnp.exp(m_prev - m_new)
        p = jnp.exp(s - m_new)                                           # (H, tq, tk) f32
        l_sc[...] = alpha * l_sc[...] + jnp.sum(p, axis=-1, keepdims=True)
        pv = jnp.einsum('hqk,hkd->hqd', p.astype(kv_h.dtype), kv_h,
                        preferred_element_type=jnp.float32)              # (H, tq, d)
        acc_sc[...] = alpha * acc_sc[...] + pv
        m_sc[...] = m_new

        @pl.when(kv_idx == pl.num_programs(2) - 1)
        def _finalize():
            inv_l = pl.reciprocal(l_sc[...], approx=False)   # exact; once per q tile
            ctx = acc_sc[...] * inv_l                        # (H, tq, d)
            # Single lane-dense (tq, H*d) store (no per-head masked partial stores).
            o_ref[0] = (jnp.transpose(ctx, (1, 0, 2))
                        .reshape(tq, H * d)
                        .astype(o_ref.dtype))

    return kernel


def pallas_flash_attention(qkv, attention_mask, num_heads, head_dim, scale):
    """qkv: (B, S, H*d) shared Q/K/V projection; mask: (B,1,1,S) additive f32 or None.

    Returns context in (B, S, H*d) layout (ready for the output projection).
    """
    B, S, HD = qkv.shape
    assert HD == num_heads * head_dim
    # 256-wide tiles fill the 256x256 MXU on v6e/v7x and halve per-step grid overhead;
    # fall back to 128, then full-S for short sequences.
    tq = _pick_tile(S, (256, 128))
    tk = _pick_tile(S, (256, 128))
    has_mask = attention_mask is not None

    kernel = _make_flash_attn_kernel(num_heads, head_dim, scale, has_mask)

    in_specs = [
        pl.BlockSpec((1, tq, HD), lambda b, qi, ki: (b, qi, 0)),   # Q tile (resident)
        pl.BlockSpec((1, tk, HD), lambda b, qi, ki: (b, ki, 0)),   # shared K/V tile
    ]
    args = [qkv, qkv]
    if has_mask:
        in_specs.append(pl.BlockSpec((1, 1, 1, tk), lambda b, qi, ki: (b, 0, 0, ki)))
        args.append(attention_mask)

    # KV tiles are re-streamed once per query tile: bytes ~ B*S*HD*(2 + S/tq).
    cost = pl.CostEstimate(
        flops=4 * B * num_heads * S * S * head_dim,
        transcendentals=B * num_heads * S * S,
        bytes_accessed=int(B * S * HD * (2 + S // tq)) * qkv.dtype.itemsize,
    )

    return pl.pallas_call(
        kernel,
        out_shape=jax.ShapeDtypeStruct((B, S, HD), qkv.dtype),
        grid=(B, S // tq, S // tk),
        in_specs=in_specs,
        out_specs=pl.BlockSpec((1, tq, HD), lambda b, qi, ki: (b, qi, 0)),
        scratch_shapes=[
            pltpu.VMEM((num_heads, tq, 1), jnp.float32),           # running max m_i
            pltpu.VMEM((num_heads, tq, 1), jnp.float32),           # running sum l_i
            pltpu.VMEM((num_heads, tq, head_dim), jnp.float32),    # unnormalized ctx
            pltpu.VMEM((num_heads, tq, head_dim), qkv.dtype),      # scaled Q cache
        ],
        compiler_params=pltpu.CompilerParams(
            dimension_semantics=("parallel", "parallel", "arbitrary")),
        cost_estimate=cost,
    )(*args)


# --------------------------------------------------------------------------
# Parameters & full forward
# --------------------------------------------------------------------------
def init_params(key, hidden_size, num_heads, head_dim, dtype=jnp.float32):
    """Mimics the PyTorch kaiming_uniform_(a=sqrt(5)) init; weights also stored
    pre-transposed to (in, out) once so the matmul kernel never transposes per call."""
    proj_dim = num_heads * head_dim
    k1, k2, k3, k4 = jax.random.split(key, 4)
    bound_q = 1.0 / math.sqrt(hidden_size)
    wq = jax.random.uniform(k1, (proj_dim, hidden_size), dtype, -bound_q, bound_q)
    bq = jax.random.uniform(k2, (proj_dim,), dtype, -bound_q, bound_q)
    bound_o = 1.0 / math.sqrt(proj_dim)
    wo = jax.random.uniform(k3, (hidden_size, proj_dim), dtype, -bound_o, bound_o)
    bo = jax.random.uniform(k4, (hidden_size,), dtype, -bound_o, bound_o)
    return dict(wq=wq, bq=bq, wo=wo, bo=bo, wq_t=wq.T, wo_t=wo.T)


def tensor_parallel_attention_forward(hidden_states, params, num_heads,
                                      attention_mask=None,
                                      compute_dtype=jnp.bfloat16):
    """hidden_states: (B, S, hidden). Returns (B, S, hidden) in hidden_states.dtype.

    compute_dtype=bfloat16 is the fast MXU path (f32 accumulation, f32 biases/softmax).
    """
    B, S, Hm = hidden_states.shape
    proj_dim = params["wq_t"].shape[1]
    head_dim = proj_dim // num_heads
    scale = 1.0 / math.sqrt(head_dim)
    cdt = jnp.dtype(compute_dtype)

    # Shared Q/K/V projection (self.key = self.value = self.query) — applied once.
    x2 = hidden_states.reshape(B * S, Hm).astype(cdt)
    qkv = pallas_linear(x2, params["wq_t"].astype(cdt),
                        params["bq"].astype(jnp.float32),
                        out_dtype=cdt).reshape(B, S, proj_dim)

    mask = None
    if attention_mask is not None:
        mask = jnp.broadcast_to(attention_mask, (B, 1, 1, S)).astype(jnp.float32)

    # Context comes out lane-dense in (B, S, H*d) — no transposes before the output proj.
    ctx = pallas_flash_attention(qkv, mask, num_heads, head_dim, scale)

    out = pallas_linear(ctx.reshape(B * S, proj_dim),
                        params["wo_t"].astype(cdt),
                        params["bo"].astype(jnp.float32),
                        out_dtype=hidden_states.dtype)
    return out.reshape(B, S, Hm)


# --------------------------------------------------------------------------
# Pure-JAX reference (mirrors the PyTorch forward in f32)
# --------------------------------------------------------------------------
def reference_forward(hidden_states, params, num_heads, attention_mask=None):
    B, S, Hm = hidden_states.shape
    proj_dim = params["wq"].shape[0]
    head_dim = proj_dim // num_heads
    x = hidden_states.astype(jnp.float32)
    qkv = x @ params["wq"].T.astype(jnp.float32) + params["bq"].astype(jnp.float32)
    qkv4 = qkv.reshape(B, S, num_heads, head_dim).transpose(0, 2, 1, 3)
    s = jnp.einsum("bhqd,bhkd->bhqk", qkv4, qkv4) / math.sqrt(head_dim)
    if attention_mask is not None:
        s = s + attention_mask.astype(jnp.float32)
    p = jax.nn.softmax(s, axis=-1)
    ctx = jnp.einsum("bhqk,bhkd->bhqd", p, qkv4)
    ctx2 = ctx.transpose(0, 2, 1, 3).reshape(B, S, proj_dim)
    out = ctx2 @ params["wo"].T.astype(jnp.float32) + params["bo"].astype(jnp.float32)
    return out.astype(hidden_states.dtype)


# --------------------------------------------------------------------------
# Main
# --------------------------------------------------------------------------
if __name__ == "__main__":
    B, S, HIDDEN, HEADS = 2, 8, 32, 4
    key = jax.random.PRNGKey(0)
    kx, kp = jax.random.split(key)

    x = jax.random.normal(kx, (B, S, HIDDEN), dtype=jnp.float32)
    params = init_params(kp, HIDDEN, HEADS, HIDDEN // HEADS)

    # ---- bf16 MXU path, no mask ----
    ref = reference_forward(x, params, HEADS, attention_mask=None)
    out = jax.block_until_ready(
        tensor_parallel_attention_forward(x, params, HEADS, attention_mask=None))
    assert out.shape == (B, S, HIDDEN) and out.dtype == x.dtype
    assert jnp.allclose(out, ref, atol=5e-2, rtol=5e-2), "bf16 mismatch (no mask)"

    # ---- bf16 MXU path, additive padding mask: last quarter of keys masked out ----
    key_pos = jnp.arange(S)
    mask1d = jnp.where(key_pos < (3 * S) // 4, 0.0, -1e9).astype(jnp.float32)
    mask = jnp.broadcast_to(mask1d.reshape(1, 1, 1, S), (B, 1, 1, S))
    ref_m = reference_forward(x, params, HEADS, attention_mask=mask)
    out_m = jax.block_until_ready(
        tensor_parallel_attention_forward(x, params, HEADS, attention_mask=mask))
    assert jnp.allclose(out_m, ref_m, atol=5e-2, rtol=5e-2), "bf16 mismatch (mask)"

    # ---- f32 strict-parity path ----
    out_f32 = jax.block_until_ready(
        tensor_parallel_attention_forward(x, params, HEADS, attention_mask=mask,
                                          compute_dtype=jnp.float32))
    assert jnp.allclose(out_f32, ref_m, atol=2e-3, rtol=2e-3), "f32 mismatch (mask)"

    print("KERNEL_OK")
</pallas_src>

<mosaic_0001>
module attributes {stable_mosaic.version = 11 : i64} {
  func.func @_linear_kernel(%arg0: i32, %arg1: i32, %arg2: i32, %arg3: memref<16x32xbf16, #tpu.memory_space<vmem>>, %arg4: memref<32x32xbf16, #tpu.memory_space<vmem>>, %arg5: memref<1x32xf32, #tpu.memory_space<vmem>>, %arg6: memref<16x32xbf16, #tpu.memory_space<vmem>>, %arg7: memref<16x32xf32, #tpu.memory_space<vmem>>) attributes {dimension_semantics = [#tpu.dimension_semantics<parallel>, #tpu.dimension_semantics<parallel>, #tpu.dimension_semantics<arbitrary>], iteration_bounds = array<i64: 1, 1, 1>, scalar_prefetch = 0 : i64, scratch_operands = 1 : i64, tpu.core_type = #tpu.core_type<tc>, window_params = [{transform_indices = @transform_0, window_bounds = array<i64: 16, 32>}, {transform_indices = @transform_1, window_bounds = array<i64: 32, 32>}, {transform_indices = @transform_2, window_bounds = array<i64: 1, 32>}, {transform_indices = @transform_3, window_bounds = array<i64: 16, 32>}]} {
    %c0_i32 = arith.constant 0 : i32
    %0 = arith.cmpi eq, %arg2, %c0_i32 : i32
    %1 = arith.extui %0 : i1 to i32
    %c0_i32_0 = arith.constant 0 : i32
    %2 = arith.cmpi ne, %1, %c0_i32_0 : i32
    scf.if %2 {
      %cst_10 = arith.constant 0.000000e+00 : f32
      %12 = vector.broadcast %cst_10 : f32 to vector<16x32xf32>
      %c0_11 = arith.constant 0 : index
      %c0_12 = arith.constant 0 : index
      %13 = vector.load %arg7[%c0_11, %c0_12] : memref<16x32xf32, #tpu.memory_space<vmem>>, vector<16x32xf32>
      tpu.vector_store %arg7[%c0_11, %c0_12], %12 {strides = array<i32>} : memref<16x32xf32, #tpu.memory_space<vmem>>, vector<16x32xf32>,
    } else {
    }
    %c0 = arith.constant 0 : index
    %c0_1 = arith.constant 0 : index
    %3 = vector.load %arg7[%c0, %c0_1] : memref<16x32xf32, #tpu.memory_space<vmem>>, vector<16x32xf32>
    %c0_2 = arith.constant 0 : index
    %c0_3 = arith.constant 0 : index
    %4 = vector.load %arg3[%c0_2, %c0_3] : memref<16x32xbf16, #tpu.memory_space<vmem>>, vector<16x32xbf16>
    %c0_4 = arith.constant 0 : index
    %c0_5 = arith.constant 0 : index
    %5 = vector.load %arg4[%c0_4, %c0_5] : memref<32x32xbf16, #tpu.memory_space<vmem>>, vector<32x32xbf16>
    %cst = arith.constant dense<0.000000e+00> : vector<16x32xf32>
    %6 = tpu.matmul %4, %5, %cst {dimension_numbers = #tpu.dot_dimension_numbers<[1], [0], [0], [1], [0, 0, 1, 1], [], []>} : vector<16x32xbf16>, vector<32x32xbf16>, vector<16x32xf32> -> vector<16x32xf32>
    %7 = arith.addf %3, %6 : vector<16x32xf32>
    %c0_6 = arith.constant 0 : index
    %c0_7 = arith.constant 0 : index
    %8 = vector.load %arg7[%c0_6, %c0_7] : memref<16x32xf32, #tpu.memory_space<vmem>>, vector<16x32xf32>
    tpu.vector_store %arg7[%c0_6, %c0_7], %7 {strides = array<i32>} : memref<16x32xf32, #tpu.memory_space<vmem>>, vector<16x32xf32>,
    %c0_i32_8 = arith.constant 0 : i32
    %9 = arith.cmpi eq, %arg2, %c0_i32_8 : i32
    %10 = arith.extui %9 : i1 to i32
    %c0_i32_9 = arith.constant 0 : i32
    %11 = arith.cmpi ne, %10, %c0_i32_9 : i32
    scf.if %11 {
      %c0_10 = arith.constant 0 : index
      %c0_11 = arith.constant 0 : index
      %12 = vector.load %arg7[%c0_10, %c0_11] : memref<16x32xf32, #tpu.memory_space<vmem>>, vector<16x32xf32>
      %c0_12 = arith.constant 0 : index
      %c0_13 = arith.constant 0 : index
      %13 = vector.load %arg5[%c0_12, %c0_13] : memref<1x32xf32, #tpu.memory_space<vmem>>, vector<1x32xf32>
      %14 = vector.broadcast %13 : vector<1x32xf32> to vector<16x32xf32>
      %15 = arith.addf %12, %14 : vector<16x32xf32>
      %16 = arith.truncf %15 : vector<16x32xf32> to vector<16x32xbf16>
      %c0_14 = arith.constant 0 : index
      %c0_15 = arith.constant 0 : index
      %17 = vector.load %arg6[%c0_14, %c0_15] : memref<16x32xbf16, #tpu.memory_space<vmem>>, vector<16x32xbf16>
      tpu.vector_store %arg6[%c0_14, %c0_15], %16 {strides = array<i32>} : memref<16x32xbf16, #tpu.memory_space<vmem>>, vector<16x32xbf16>,
    } else {
    }
    return
  }
  func.func @transform_0(%arg0: i32, %arg1: i32, %arg2: i32) -> (i32, i32) {
    %c0_i32 = arith.constant 0 : i32
    return %arg0, %arg2 : i32, i32
  }
  func.func @transform_1(%arg0: i32, %arg1: i32, %arg2: i32) -> (i32, i32) {
    %c0_i32 = arith.constant 0 : i32
    return %arg2, %arg1 : i32, i32
  }
  func.func @transform_2(%arg0: i32, %arg1: i32, %arg2: i32) -> (i32, i32) {
    %c0_i32 = arith.constant 0 : i32
    %c0_i32_0 = arith.constant 0 : i32
    return %c0_i32, %arg1 : i32, i32
  }
  func.func @transform_3(%arg0: i32, %arg1: i32, %arg2: i32) -> (i32, i32) {
    %c0_i32 = arith.constant 0 : i32
    return %arg0, %arg1 : i32, i32
  }
}

</mosaic_0001>

<llo_original>
// kernel: tpu_custom_call.1
$region0: #{tpu_custom_call.1}
  #allocation0 [shape = 'u32[]', space=smem, size = 0x4, offset = 0x4, fixed_abs, tag = 'smem constant byte address 0x4 - core index']
  #allocation1 [shape = 'u32[144,128]{1,0:T(1,128)}', space=vmem, size = 0x12000, scoped, tag = 'internal scratch']
  #allocation2 [shape = 'f32[16,32]{1,0:T(8,128)}', space=vmem, size = 0x2000, scoped, tag = 'scratch operand']
  %s0 = inlined_call_operand.hbm [shape: bf16[16,32], index: 0, kind: input, shape index: {}]
  %s1 = inlined_call_operand.hbm [shape: bf16[32,32], index: 1, kind: input, shape index: {}]
  %s2 = inlined_call_operand.vmem [shape: f32[1,32], index: 2, kind: input, shape index: {}]
  %s3 = inlined_call_operand.hbm [shape: bf16[16,32], index: 3, kind: output, shape index: {}]
  %s4 = sld [smem:[#allocation0]]
  $region38: #{tpu_custom_call.1} parent=0
    _
  %s6 = ssub.s32 1, %s4
  %s7 = scalar_select 0, %s6, %s4
  $region1: #{tpu_custom_call.1} parent=0
    #allocation3 [shape = 'u8[4096]{0}', space=vmem, size = 0x1000, scoped, tag = 'input window, operand 0, single buffered']
    #allocation4 [shape = 's32[1]{0}', space=sflag, size = 0x4, scoped, tag = 'scoped memory for tpu_custom_call.1']
    #allocation5 [shape = 's32[1]{0}', space=sflag, size = 0x4, scoped, tag = 'scoped memory for tpu_custom_call.1']
    #allocation6 [shape = 'u8[8192]{0}', space=vmem, size = 0x2000, scoped, tag = 'input window, operand 1, single buffered']
    #allocation7 [shape = 's32[1]{0}', space=sflag, size = 0x4, scoped, tag = 'scoped memory for tpu_custom_call.1']
    #allocation8 [shape = 'u8[4096]{0}', space=vmem, size = 0x1000, scoped, tag = 'output window, operand 0, single buffered']
    %8 = vsyncpa [#allocation4], 0
    %9 = vsyncpa [#allocation7], 0
    %10 = vsyncpa [#allocation5], 0
    // Predicated region
    $region2: #{tpu_custom_call.1} parent=1 // pred_check
      _
    $region3: #{tpu_custom_call.1} parent=1 // pred_check_branch
      %12 = sbr.rel (0) target = $region5
    $region4: #{tpu_custom_call.1} parent=1 // pred_region
      %s14 = ssub.s32 128, 128
      %15 = vsyncadd [#allocation4], %s14
      %s16 = sshll.u32 [#allocation3], 4
      %s17 = int_to_ptr.vmem [resolvable:$true] %s16
      %22 = dma.hbm_to_vmem [thread:$0]  %s0, 128, %s17, [#allocation4], 64, 64, 4
    $region5: #{tpu_custom_call.1} parent=1 // pred_fallthru
      _
    // Predicated region
    $region6: #{tpu_custom_call.1} parent=1 // pred_check
      _
    $region7: #{tpu_custom_call.1} parent=1 // pred_check_branch
      %24 = sbr.rel (0) target = $region9
    $region8: #{tpu_custom_call.1} parent=1 // pred_region
      %s26 = ssub.s32 256, 256
      %27 = vsyncadd [#allocation7], %s26
      %s28 = sshll.u32 [#allocation6], 4
      %s29 = int_to_ptr.vmem [resolvable:$true] %s28
      %34 = dma.hbm_to_vmem [thread:$0]  %s1, 256, %s29, [#allocation7], 64, 64, 4
    $region9: #{tpu_custom_call.1} parent=1 // pred_fallthru
      _
    // Predicated region
    $region10: #{tpu_custom_call.1} parent=1 // pred_check
      _
    $region11: #{tpu_custom_call.1} parent=1 // pred_check_branch
      %36 = sbr.rel (0) target = $region13
    $region12: #{tpu_custom_call.1} parent=1 // pred_region
      _
    $region13: #{tpu_custom_call.1} parent=1 // pred_fallthru
      _
    // Predicated region
    $region14: #{tpu_custom_call.1} parent=1 // pred_check
      _
    $region15: #{tpu_custom_call.1} parent=1 // pred_check_branch
      %38 = sbr.rel (0) target = $region17
    $region16: #{tpu_custom_call.1} parent=1 // pred_region
      %39 = dma.done [#allocation4], 128
    $region17: #{tpu_custom_call.1} parent=1 // pred_fallthru
      _
    // Predicated region
    $region18: #{tpu_custom_call.1} parent=1 // pred_check
      _
    $region19: #{tpu_custom_call.1} parent=1 // pred_check_branch
      %41 = sbr.rel (0) target = $region21
    $region20: #{tpu_custom_call.1} parent=1 // pred_region
      %42 = dma.done [#allocation7], 256
    $region21: #{tpu_custom_call.1} parent=1 // pred_fallthru
      _
    %p44 = scmp.eq.s32.totalorder 0, 0
    // Predicated region
    $region22: #{tpu_custom_call.1} parent=1 // pred_check
      %p45 = pneg %p44
    $region23: #{tpu_custom_call.1} parent=1 // pred_check_branch
      %47 = sbr.rel (%p45) target = $region25
    $region24: #{tpu_custom_call.1} parent=1 // pred_region
      %vm48 = vcmask 261120
      %49 = vst.msk [vmem:[#allocation2] sm:$0xff] %vm48, 0.0
      %50 = vst.msk [vmem:[#allocation2 + $0x8] sm:$0xff] %vm48, 0.0
    $region25: #{tpu_custom_call.1} parent=1 // pred_fallthru
      _
    %v51 = vld [vmem:[#allocation2] sm:$0xff]
    %v52 = vld [vmem:[#allocation2 + $0x8] sm:$0xff]
    %v53 = vld [vmem:[#allocation3] sm:$0xf]
    %v54 = vld [vmem:[#allocation3 + $0x4] sm:$0xf]
    %v55 = vld [vmem:[#allocation6] sm:$0xf]
    %v56 = vld [vmem:[#allocation6 + $0x4] sm:$0xf]
    %v57 = vld [vmem:[#allocation6 + $0x8] sm:$0xf]
    %v58 = vld [vmem:[#allocation6 + $0xc] sm:$0xf]
    %v61 = vunpack.c.l.b16 %v53
    %v62 = vunpack.c.l.b16 %v54
    %v63 = vpack.c.b16 %v62, %v61
    %v68 = vunpack.c.l.b16 %v55
    %v69 = vunpack.c.l.b16 %v56
    %v70 = vunpack.c.l.b16 %v57
    %v71 = vunpack.c.l.b16 %v58
    %v72 = vpack.c.b16 %v69, %v68
    %v73 = vpack.c.b16 %v71, %v70
    %vm76 = vcmask 261120
    %v78 = vsel %vm76, %v63, 0
    %80 = vmatprep.subr.bf16.mxu0 0
    %81 = vmatpush1.bf16.msra.mxu0 %v72
    %82 = vmatprep.subr.bf16.mxu0 0
    %83 = vmatpush1.bf16.msra.mxu0 %v73
    %84 = vmatprep.subr.bf16.mxu0 0
    %85 = vmatpush1.bf16.msra.mxu0 0
    %86 = vmatprep.subr.bf16.mxu0 0
    %87 = vmatpush1.bf16.msra.mxu0 0
    %88 = vmatprep.subr.bf16.mxu0 0
    %89 = vmatpush1.bf16.msra.mxu0 0
    %90 = vmatprep.subr.bf16.mxu0 0
    %91 = vmatpush1.bf16.msra.mxu0 0
    %92 = vmatprep.subr.bf16.mxu0 0
    %93 = vmatpush1.bf16.msra.mxu0 0
    %94 = vmatprep.subr.bf16.mxu0 0
    %95 = vmatpush1.bf16.msra.mxu0 0
    %96 = vmatprep.subr.bf16.mxu0 0
    %97 = vmatpush1.bf16.msra.mxu0 0
    %98 = vmatprep.subr.bf16.mxu0 0
    %99 = vmatpush1.bf16.msra.mxu0 0
    %100 = vmatprep.subr.bf16.mxu0 0
    %101 = vmatpush1.bf16.msra.mxu0 0
    %102 = vmatprep.subr.bf16.mxu0 0
    %103 = vmatpush1.bf16.msra.mxu0 0
    %104 = vmatprep.subr.bf16.mxu0 0
    %105 = vmatpush1.bf16.msra.mxu0 0
    %106 = vmatprep.subr.bf16.mxu0 0
    %107 = vmatpush1.bf16.msra.mxu0 0
    %108 = vmatprep.subr.bf16.mxu0 0
    %109 = vmatpush1.bf16.msra.mxu0 0
    %110 = vmatprep.subr.bf16.mxu0 0
    %111 = vmatpush1.bf16.msra.mxu0 0
    %112 = vmatprep.mubr.bf16.mxu0 0
    %113 = vmatmul.mubr.bf16.gmra.mrb[0].mxu0 %v78
    %v114 = vpop.f32.mrb[0].mxu0
    %v115 = vadd.f32 0.0, %v114
    %v116 = vpop.f32.mrb[0].mxu0
    %v117 = vpop.f32.mrb[0].mxu0
    %v118 = vadd.f32 0.0, %v117
    %v119 = vpop.f32.mrb[0].mxu0
    %120 = vdwg.mxu0
    %v121 = vadd.f32 %v51, %v115
    %v122 = vadd.f32 %v52, %v118
    %123 = vst.msk [vmem:[#allocation2] sm:$0xff] %vm76, %v121
    %124 = vst.msk [vmem:[#allocation2 + $0x8] sm:$0xff] %vm76, %v122
    // Predicated region
    $region26: #{tpu_custom_call.1} parent=1 // pred_check
      %p125 = pneg %p44
    $region27: #{tpu_custom_call.1} parent=1 // pred_check_branch
      %127 = sbr.rel (%p125) target = $region29
    $region28: #{tpu_custom_call.1} parent=1 // pred_region
      %v128 = vld [vmem:[#allocation2] sm:$0xff]
      %v129 = vld [vmem:[#allocation2 + $0x8] sm:$0xff]
      %v130 = vld [vmem:[%s2] sm:$0x1]
      %v132 = vlaneseq
      %v133 = vshrl.u32 %v132, 7
      %v134 = vsub.s32 0, %v133
      %v135 = vrot.slane %v130, %v134
      %v137 = vadd.f32 %v128, %v135
      %v138 = vadd.f32 %v129, %v135
      %v139 = vpack.c.bf16 %v138, %v137
      %v141 = vunpack.c.l.b16 %v139
      %v142 = vunpack.c.h.b16 %v139
      %v143 = vpack.c.b16 %v141, %v141
      %v144 = vpack.c.b16 %v142, %v142
      %vm147 = vcmask 257024
      %148 = vst.msk [vmem:[#allocation8] sm:$0xf] %vm147, %v143
      %149 = vst.msk [vmem:[#allocation8 + $0x4] sm:$0xf] %vm147, %v144
    $region29: #{tpu_custom_call.1} parent=1 // pred_fallthru
      _
    // Predicated region
    $region30: #{tpu_custom_call.1} parent=1 // pred_check
      _
    $region31: #{tpu_custom_call.1} parent=1 // pred_check_branch
      %151 = sbr.rel (0) target = $region33
    $region32: #{tpu_custom_call.1} parent=1 // pred_region
      %s153 = ssub.s32 128, 128
      %154 = vsyncadd [#allocation5], %s153
      %s155 = sshll.u32 [#allocation8], 4
      %s156 = int_to_ptr.vmem [resolvable:$true] %s155
      %161 = dma.vmem_to_hbm [thread:$0]  %s156, 128, %s3, [#allocation5], 64, 64, 4
    $region33: #{tpu_custom_call.1} parent=1 // pred_fallthru
      _
    // Predicated region
    $region34: #{tpu_custom_call.1} parent=1 // pred_check
      _
    $region35: #{tpu_custom_call.1} parent=1 // pred_check_branch
      %163 = sbr.rel (0) target = $region37
    $region36: #{tpu_custom_call.1} parent=1 // pred_region
      %164 = dma.done [#allocation5], 128
    $region37: #{tpu_custom_call.1} parent=1 // pred_fallthru
      _
    %165 = vsyncpa [#allocation4], 1
    %166 = vsyncpa [#allocation7], 1
    %167 = vsyncpa [#allocation5], 1

</llo_original>
